<compile_context>
chip_gen: v6e
topology: v6e:2x2x1
jax: 0.10.0
libtpu: 0.0.40
codegen_flags: <defaults>
</compile_context>

<pallas_src>
import functools

import jax
import jax.numpy as jnp
import numpy as np
from jax import lax
from jax.experimental import pallas as pl
from jax.experimental.pallas import tpu as pltpu

EPS = 1e-5  # torch.nn.InstanceNorm2d default eps


def _round_up(v, m):
    return (v + m - 1) // m * m


def _sampling_block_kernel(patch_ref, w_ref, o_ref, acc_ref, s_ref, ss_ref,
                           *, inv_p, tp):
    # patch_ref: (1, Kp, TP) bf16    w_ref: (TC, Kp) bf16
    # o_ref:     (1, TC, Pp) out dtype (written only on the last P step)
    # acc_ref:   (TC, Pp) f32 resident conv result for the current (n, c-tile)
    # s_ref/ss_ref: (TC, 1) f32 running sum / sum-of-squares over P
    p = pl.program_id(2)

    @pl.when(p == 0)
    def _():
        s_ref[...] = jnp.zeros_like(s_ref)
        ss_ref[...] = jnp.zeros_like(ss_ref)

    # Conv tile as (TC, Kp) @ (Kp, TP) on the MXU with f32 accumulation.
    y = jnp.dot(w_ref[...], patch_ref[0], preferred_element_type=jnp.float32)

    # Single-pass InstanceNorm statistics.  No bias is added (it cancels in the
    # mean subtraction), so zero-padded P columns contribute exactly 0 to both
    # sums and dividing by the *real* P below is exact.
    s_ref[...] += jnp.sum(y, axis=-1, keepdims=True)
    ss_ref[...] += jnp.sum(y * y, axis=-1, keepdims=True)

    off = pl.multiple_of(p * tp, 128)
    acc_ref[:, pl.ds(off, tp)] = y

    @pl.when(p == pl.num_programs(2) - 1)
    def _():
        mean = s_ref[...] * inv_p                               # (TC, 1)
        var = jnp.maximum(ss_ref[...] * inv_p - mean * mean, 0.0)
        inv = lax.rsqrt(var + EPS)
        # Normalize + ReLU the resident block; single lane-dense store.
        o_ref[0] = jnp.maximum(acc_ref[...] * inv - mean * inv,
                               0.0).astype(o_ref.dtype)


def _im2col(x, k, stride, padding, k_pad, p_pad):
    """x: (N, C, H, W) -> patches (N, k_pad, p_pad) (zero padded)."""
    N, C, H, W = x.shape
    xp = jnp.pad(x, ((0, 0), (0, 0), (padding, padding), (padding, padding)))
    Ho = (H + 2 * padding - k) // stride + 1
    Wo = (W + 2 * padding - k) // stride + 1
    cols = []
    for i in range(k):
        for j in range(k):
            cols.append(xp[:, :, i:i + stride * Ho:stride, j:j + stride * Wo:stride])
    # (N, C, k*k, Ho, Wo) -> (N, C*k*k, P); K ordering (C_in-major, then kernel
    # position) matches weight.reshape(C_out, C_in*k*k).
    patches = jnp.stack(cols, axis=2).reshape(N, C * k * k, Ho * Wo)
    patches = jnp.pad(patches,
                      ((0, 0), (0, k_pad - C * k * k), (0, p_pad - Ho * Wo)))
    return patches, Ho, Wo


def _pick_c_tile(c_out, n_batch, requested):
    if requested is not None:
        if c_out % requested != 0:
            raise ValueError("block_c_out must divide C_out")
        return requested
    tc = c_out
    for cand in (256, 128):                      # MXU / lane friendly tiles
        if c_out % cand == 0:
            tc = cand
            break
    else:
        if c_out > 256:
            for cand in range(256, 7, -1):
                if cand % 8 == 0 and c_out % cand == 0:
                    tc = cand
                    break
    # v7x megacore: with a single batch keep >= 2 "parallel" grid steps so the
    # second TensorCore is not idle.
    if n_batch == 1 and tc == c_out and c_out % 16 == 0:
        tc = c_out // 2
    return tc


def _pick_p_tile(p):
    return min(2048, _round_up(max(p, 1), 128))


def _vmem_cap_bytes():
    try:
        cap = getattr(pltpu.get_tpu_info(), "vmem_capacity_bytes", None)
        if cap:
            return int(cap) - (8 << 20)          # headroom for Mosaic internals
    except Exception:
        pass
    return 48 << 20  # conservative fallback; fits v7x's 64 MiB physical VMEM


@functools.partial(jax.jit, static_argnames=("kernel_size", "stride", "padding",
                                             "block_c_out", "out_dtype"))
def sampling_block(x, weight, bias, *, kernel_size, stride, padding,
                   block_c_out=None, out_dtype=jnp.bfloat16):
    """Forward pass of SamplingBlock (Conv2d -> InstanceNorm2d -> ReLU).

    x:      (N, C_in, H, W)            float32, NCHW
    weight: (C_out, C_in, k, k)        float32 (PyTorch Conv2d layout)
    bias:   (C_out,)                   accepted for API parity; cancelled
                                       exactly by InstanceNorm's mean subtraction
    returns (N, C_out, H_out, W_out)   out_dtype (bf16 default), NCHW
    """
    del bias  # (y + b) - mean(y + b) == y - mean(y): bias cancels exactly.
    N, C_in, H, W = x.shape
    C_out = weight.shape[0]
    K = C_in * kernel_size * kernel_size
    Kp = _round_up(K, 16)                        # bf16 packs 16 sublanes/vreg

    Ho = (H + 2 * padding - kernel_size) // stride + 1
    Wo = (W + 2 * padding - kernel_size) // stride + 1
    P = Ho * Wo
    TP = _pick_p_tile(P)
    Pp = _round_up(P, TP)
    NP = Pp // TP

    patches, Ho, Wo = _im2col(x.astype(jnp.bfloat16), kernel_size, stride,
                              padding, Kp, Pp)                 # (N, Kp, Pp) bf16

    w_mat = weight.reshape(C_out, K)
    w_mat = jnp.pad(w_mat, ((0, 0), (0, Kp - K))).astype(jnp.bfloat16)

    TC = _pick_c_tile(C_out, N, block_c_out)
    NC = C_out // TC

    # Generation-aware scoped-VMEM budget: true double-buffered block sum plus
    # headroom, capped by the chip's physical VMEM.
    out_bytes = jnp.dtype(out_dtype).itemsize
    need = (2 * Kp * TP * 2              # patch block (bf16, double-buffered)
            + 2 * TC * Kp * 2            # weight block
            + 2 * TC * Pp * out_bytes    # output block
            + TC * Pp * 4                # resident conv accumulator scratch
            + 2 * TC * 4 * 2)            # sum / sumsq scratches
    vmem_limit = int(min(_vmem_cap_bytes(), max(need + (4 << 20), 32 << 20)))

    kernel = functools.partial(_sampling_block_kernel, inv_p=1.0 / P, tp=TP)

    out = pl.pallas_call(
        kernel,
        out_shape=jax.ShapeDtypeStruct((N, C_out, Pp), out_dtype),
        grid_spec=pltpu.PrefetchScalarGridSpec(
            num_scalar_prefetch=0,
            grid=(N, NC, NP),            # P (norm reduction axis) innermost
            in_specs=[
                pl.BlockSpec((1, Kp, TP), lambda n, c, p: (n, 0, p)),
                pl.BlockSpec((TC, Kp), lambda n, c, p: (c, 0)),
            ],
            out_specs=pl.BlockSpec((1, TC, Pp), lambda n, c, p: (n, c, 0)),
            scratch_shapes=[
                pltpu.VMEM((TC, Pp), jnp.float32),   # resident conv result
                pltpu.VMEM((TC, 1), jnp.float32),    # running sum
                pltpu.VMEM((TC, 1), jnp.float32),    # running sum of squares
            ],
        ),
        compiler_params=pltpu.CompilerParams(
            dimension_semantics=("parallel", "parallel", "arbitrary"),
            vmem_limit_bytes=vmem_limit),
    )(patches, w_mat)

    # (N, C_out, Pp) -> drop P padding -> NCHW (pure reshape, no transpose).
    return out[:, :, :P].reshape(N, C_out, Ho, Wo)


def _reference(x, weight, bias, *, kernel_size, stride, padding, bf16_inputs=False):
    """Pure-JAX reference (conv + bias + instance norm + relu), f32 output."""
    if bf16_inputs:  # same input quantization as the kernel, f32 accumulation
        x = x.astype(jnp.bfloat16)
        weight = weight.astype(jnp.bfloat16)
    y = lax.conv_general_dilated(
        x, weight, window_strides=(stride, stride),
        padding=[(padding, padding), (padding, padding)],
        dimension_numbers=("NCHW", "OIHW", "NCHW"),
        preferred_element_type=jnp.float32)
    y = y + bias.reshape(1, -1, 1, 1).astype(jnp.float32)
    mean = jnp.mean(y, axis=(2, 3), keepdims=True)
    var = jnp.mean((y - mean) ** 2, axis=(2, 3), keepdims=True)
    y = (y - mean) * lax.rsqrt(var + EPS)
    return jnp.maximum(y, 0.0)


if __name__ == "__main__":
    # Small shapes consistent with a CycleGAN downsampling block.
    N, C_in, C_out = 2, 4, 8
    H = W = 16
    kernel_size, stride, padding = 3, 2, 1

    key = jax.random.PRNGKey(0)
    kx, kw, kb = jax.random.split(key, 3)
    x = jax.random.normal(kx, (N, C_in, H, W), dtype=jnp.float32)
    fan_in = C_in * kernel_size * kernel_size
    bound = 1.0 / np.sqrt(fan_in)
    weight = jax.random.uniform(kw, (C_out, C_in, kernel_size, kernel_size),
                                dtype=jnp.float32, minval=-bound, maxval=bound)
    bias = jax.random.uniform(kb, (C_out,), dtype=jnp.float32,
                              minval=-bound, maxval=bound)

    out = sampling_block(x, weight, bias, kernel_size=kernel_size,
                         stride=stride, padding=padding)
    out = jax.block_until_ready(out)
    out_f32 = np.asarray(out).astype(np.float32)

    # Check against a reference with the same bf16 input quantization (validates
    # conv / instance-norm / relu math, the layout, and the bias cancellation);
    # tolerance covers the bf16 output cast.
    ref_bf16 = _reference(x, weight, bias, kernel_size=kernel_size,
                          stride=stride, padding=padding, bf16_inputs=True)
    np.testing.assert_allclose(out_f32, np.asarray(ref_bf16),
                               rtol=2e-2, atol=2e-2)

    # Loose sanity check against the full-f32 PyTorch-equivalent reference
    # (remaining differences are bf16 quantization noise only).
    ref_f32 = _reference(x, weight, bias, kernel_size=kernel_size,
                         stride=stride, padding=padding)
    np.testing.assert_allclose(out_f32, np.asarray(ref_f32),
                               rtol=1e-1, atol=1e-1)

    print("KERNEL_OK")
</pallas_src>

<mosaic_0001>
module attributes {stable_mosaic.version = 11 : i64} {
  func.func @_sampling_block_kernel(%arg0: i32, %arg1: i32, %arg2: i32, %arg3: memref<1x48x128xbf16, #tpu.memory_space<vmem>>, %arg4: memref<8x48xbf16, #tpu.memory_space<vmem>>, %arg5: memref<1x8x128xbf16, #tpu.memory_space<vmem>>, %arg6: memref<8x128xf32, #tpu.memory_space<vmem>>, %arg7: memref<8x1xf32, #tpu.memory_space<vmem>>, %arg8: memref<8x1xf32, #tpu.memory_space<vmem>>) attributes {dimension_semantics = [#tpu.dimension_semantics<parallel>, #tpu.dimension_semantics<parallel>, #tpu.dimension_semantics<arbitrary>], iteration_bounds = array<i64: 2, 1, 1>, scalar_prefetch = 0 : i64, scratch_operands = 3 : i64, tpu.core_type = #tpu.core_type<tc>, window_params = [{transform_indices = @transform_0, window_bounds = array<i64: 1, 48, 128>}, {transform_indices = @transform_1, window_bounds = array<i64: 8, 48>}, {transform_indices = @transform_2, window_bounds = array<i64: 1, 8, 128>}]} {
    %c0_i32 = arith.constant 0 : i32
    %0 = arith.cmpi eq, %arg2, %c0_i32 : i32
    %1 = arith.extui %0 : i1 to i32
    %c0_i32_0 = arith.constant 0 : i32
    %2 = arith.cmpi ne, %1, %c0_i32_0 : i32
    scf.if %2 {
      %cst_18 = arith.constant 0.000000e+00 : f32
      %25 = vector.broadcast %cst_18 : f32 to vector<8x1xf32>
      %c0_19 = arith.constant 0 : index
      %c0_20 = arith.constant 0 : index
      %26 = vector.load %arg7[%c0_19, %c0_20] : memref<8x1xf32, #tpu.memory_space<vmem>>, vector<8x1xf32>
      tpu.vector_store %arg7[%c0_19, %c0_20], %25 {strides = array<i32>} : memref<8x1xf32, #tpu.memory_space<vmem>>, vector<8x1xf32>,
      %cst_21 = arith.constant 0.000000e+00 : f32
      %27 = vector.broadcast %cst_21 : f32 to vector<8x1xf32>
      %c0_22 = arith.constant 0 : index
      %c0_23 = arith.constant 0 : index
      %28 = vector.load %arg8[%c0_22, %c0_23] : memref<8x1xf32, #tpu.memory_space<vmem>>, vector<8x1xf32>
      tpu.vector_store %arg8[%c0_22, %c0_23], %27 {strides = array<i32>} : memref<8x1xf32, #tpu.memory_space<vmem>>, vector<8x1xf32>,
    } else {
    }
    %c0 = arith.constant 0 : index
    %c0_1 = arith.constant 0 : index
    %3 = vector.load %arg4[%c0, %c0_1] : memref<8x48xbf16, #tpu.memory_space<vmem>>, vector<8x48xbf16>
    %c0_2 = arith.constant 0 : index
    %c0_3 = arith.constant 0 : index
    %c0_4 = arith.constant 0 : index
    %4 = vector.load %arg3[%c0_2, %c0_3, %c0_4] : memref<1x48x128xbf16, #tpu.memory_space<vmem>>, vector<1x48x128xbf16>
    %5 = vector.shape_cast %4 : vector<1x48x128xbf16> to vector<48x128xbf16>
    %cst = arith.constant dense<0.000000e+00> : vector<8x128xf32>
    %6 = tpu.matmul %3, %5, %cst {dimension_numbers = #tpu.dot_dimension_numbers<[1], [0], [0], [1], [0, 0, 1, 1], [], []>} : vector<8x48xbf16>, vector<48x128xbf16>, vector<8x128xf32> -> vector<8x128xf32>
    %c0_5 = arith.constant 0 : index
    %c0_6 = arith.constant 0 : index
    %7 = vector.load %arg7[%c0_5, %c0_6] : memref<8x1xf32, #tpu.memory_space<vmem>>, vector<8x1xf32>
    %cst_7 = arith.constant dense<0.000000e+00> : vector<8xf32>
    %8 = vector.multi_reduction <add>, %6, %cst_7 [1] : vector<8x128xf32> to vector<8xf32>
    %9 = vector.shape_cast %8 : vector<8xf32> to vector<8x1xf32>
    %10 = arith.addf %7, %9 : vector<8x1xf32>
    %c0_8 = arith.constant 0 : index
    %c0_9 = arith.constant 0 : index
    %11 = vector.load %arg7[%c0_8, %c0_9] : memref<8x1xf32, #tpu.memory_space<vmem>>, vector<8x1xf32>
    tpu.vector_store %arg7[%c0_8, %c0_9], %10 {strides = array<i32>} : memref<8x1xf32, #tpu.memory_space<vmem>>, vector<8x1xf32>,
    %c0_10 = arith.constant 0 : index
    %c0_11 = arith.constant 0 : index
    %12 = vector.load %arg8[%c0_10, %c0_11] : memref<8x1xf32, #tpu.memory_space<vmem>>, vector<8x1xf32>
    %13 = arith.mulf %6, %6 : vector<8x128xf32>
    %cst_12 = arith.constant dense<0.000000e+00> : vector<8xf32>
    %14 = vector.multi_reduction <add>, %13, %cst_12 [1] : vector<8x128xf32> to vector<8xf32>
    %15 = vector.shape_cast %14 : vector<8xf32> to vector<8x1xf32>
    %16 = arith.addf %12, %15 : vector<8x1xf32>
    %c0_13 = arith.constant 0 : index
    %c0_14 = arith.constant 0 : index
    %17 = vector.load %arg8[%c0_13, %c0_14] : memref<8x1xf32, #tpu.memory_space<vmem>>, vector<8x1xf32>
    tpu.vector_store %arg8[%c0_13, %c0_14], %16 {strides = array<i32>} : memref<8x1xf32, #tpu.memory_space<vmem>>, vector<8x1xf32>,
    %c128_i32 = arith.constant 128 : i32
    %18 = arith.muli %arg2, %c128_i32 : i32
    %19 = tpu.assume_multiple %18, 128 : i32
    %c0_15 = arith.constant 0 : index
    %20 = arith.index_cast %19 : i32 to index
    %21 = vector.load %arg6[%c0_15, %20] : memref<8x128xf32, #tpu.memory_space<vmem>>, vector<8x128xf32>
    tpu.vector_store %arg6[%c0_15, %20], %6 {strides = array<i32>} : memref<8x128xf32, #tpu.memory_space<vmem>>, vector<8x128xf32>,
    %c0_i32_16 = arith.constant 0 : i32
    %22 = arith.cmpi eq, %arg2, %c0_i32_16 : i32
    %23 = arith.extui %22 : i1 to i32
    %c0_i32_17 = arith.constant 0 : i32
    %24 = arith.cmpi ne, %23, %c0_i32_17 : i32
    scf.if %24 {
      %c0_18 = arith.constant 0 : index
      %c0_19 = arith.constant 0 : index
      %25 = vector.load %arg7[%c0_18, %c0_19] : memref<8x1xf32, #tpu.memory_space<vmem>>, vector<8x1xf32>
      %cst_20 = arith.constant 1.562500e-02 : f32
      %26 = vector.broadcast %cst_20 : f32 to vector<8x1xf32>
      %27 = arith.mulf %25, %26 : vector<8x1xf32>
      %c0_21 = arith.constant 0 : index
      %c0_22 = arith.constant 0 : index
      %28 = vector.load %arg8[%c0_21, %c0_22] : memref<8x1xf32, #tpu.memory_space<vmem>>, vector<8x1xf32>
      %cst_23 = arith.constant 1.562500e-02 : f32
      %29 = vector.broadcast %cst_23 : f32 to vector<8x1xf32>
      %30 = arith.mulf %28, %29 : vector<8x1xf32>
      %31 = arith.mulf %27, %27 : vector<8x1xf32>
      %32 = arith.subf %30, %31 : vector<8x1xf32>
      %cst_24 = arith.constant 0.000000e+00 : f32
      %33 = vector.broadcast %cst_24 : f32 to vector<8x1xf32>
      %34 = arith.maximumf %32, %33 : vector<8x1xf32>
      %cst_25 = arith.constant 9.99999974E-6 : f32
      %35 = vector.broadcast %cst_25 : f32 to vector<8x1xf32>
      %36 = arith.addf %34, %35 : vector<8x1xf32>
      %37 = math.rsqrt %36 : vector<8x1xf32>
      %c0_26 = arith.constant 0 : index
      %c0_27 = arith.constant 0 : index
      %38 = vector.load %arg6[%c0_26, %c0_27] : memref<8x128xf32, #tpu.memory_space<vmem>>, vector<8x128xf32>
      %39 = vector.broadcast %37 : vector<8x1xf32> to vector<8x128xf32>
      %40 = arith.mulf %38, %39 : vector<8x128xf32>
      %41 = arith.mulf %27, %37 : vector<8x1xf32>
      %42 = vector.broadcast %41 : vector<8x1xf32> to vector<8x128xf32>
      %43 = arith.subf %40, %42 : vector<8x128xf32>
      %cst_28 = arith.constant 0.000000e+00 : f32
      %44 = vector.broadcast %cst_28 : f32 to vector<8x128xf32>
      %45 = arith.maximumf %43, %44 : vector<8x128xf32>
      %46 = arith.truncf %45 : vector<8x128xf32> to vector<8x128xbf16>
      %c0_29 = arith.constant 0 : index
      %c0_30 = arith.constant 0 : index
      %c0_31 = arith.constant 0 : index
      %47 = vector.load %arg5[%c0_29, %c0_30, %c0_31] : memref<1x8x128xbf16, #tpu.memory_space<vmem>>, vector<1x8x128xbf16>
      %48 = vector.shape_cast %47 : vector<1x8x128xbf16> to vector<8x128xbf16>
      %49 = vector.shape_cast %46 : vector<8x128xbf16> to vector<1x8x128xbf16>
      tpu.vector_store %arg5[%c0_29, %c0_30, %c0_31], %49 {strides = array<i32>} : memref<1x8x128xbf16, #tpu.memory_space<vmem>>, vector<1x8x128xbf16>,
    } else {
    }
    return
  }
  func.func @transform_0(%arg0: i32, %arg1: i32, %arg2: i32) -> (i32, i32, i32) {
    %c0_i32 = arith.constant 0 : i32
    %c0_i32_0 = arith.constant 0 : i32
    return %arg0, %c0_i32, %arg2 : i32, i32, i32
  }
  func.func @transform_1(%arg0: i32, %arg1: i32, %arg2: i32) -> (i32, i32) {
    %c0_i32 = arith.constant 0 : i32
    %c0_i32_0 = arith.constant 0 : i32
    return %arg1, %c0_i32 : i32, i32
  }
  func.func @transform_2(%arg0: i32, %arg1: i32, %arg2: i32) -> (i32, i32, i32) {
    %c0_i32 = arith.constant 0 : i32
    %c0_i32_0 = arith.constant 0 : i32
    return %arg0, %arg1, %c0_i32 : i32, i32, i32
  }
}

</mosaic_0001>

<llo_original>
// kernel: sampling_block.1
$region0: #{sampling_block.1}
  #allocation0 [shape = 'u32[]', space=smem, size = 0x4, offset = 0x4, fixed_abs, tag = 'smem constant byte address 0x4 - core index']
  #allocation1 [shape = 'u32[144,128]{1,0:T(1,128)}', space=vmem, size = 0x12000, scoped, tag = 'internal scratch']
  #allocation2 [shape = 'f32[8,128]{1,0:T(8,128)}', space=vmem, size = 0x1000, scoped, tag = 'scratch operand']
  #allocation3 [shape = 'f32[8,1]{1,0:T(8,128)}', space=vmem, size = 0x1000, scoped, tag = 'scratch operand']
  #allocation4 [shape = 'f32[8,1]{1,0:T(8,128)}', space=vmem, size = 0x1000, scoped, tag = 'scratch operand']
  %s0 = inlined_call_operand.vmem [shape: bf16[2,48,128], index: 0, kind: input, shape index: {}]
  %s1 = inlined_call_operand.vmem [shape: bf16[8,48], index: 1, kind: input, shape index: {}]
  %s2 = inlined_call_operand.vmem [shape: bf16[2,8,128], index: 2, kind: output, shape index: {}]
  %s3 = sld [smem:[#allocation0]]
  $region49: #{sampling_block.1} parent=0
    _
  %s5 = ssub.s32 1, %s3
  %s6 = scalar_select 0, %s5, %s3
  loop: start=0, step=1, limit=4
  $region2: #{sampling_block.1} parent=0 // loop_pre_header
    _
  $region3: #{sampling_block.1} parent=0 // loop_header
    %s8 = sphi 0, %s12
    %p9 = scmp.ge.s32.totalorder %s8, 4
    %s15 = sphi 0, %s34
    %s16 = sphi 0, %s30
    %s17 = sphi 0, %s26
    %s18 = sphi 0, %s15
    %s19 = sphi 0, %s16
    %s20 = sphi 0, %s17
    %s21 = sphi 0, %s18
    %s22 = sphi 0, %s19
    %s23 = sphi 0, %s20
    %s39 = sphi 0, %s41
    %s42 = sphi 0, %s39
    %s43 = sphi 0, %s42
    %s59 = sphi 0, %s43
    %s65 = sphi 0, %s67
    %s68 = sphi 0, %s65
    %s69 = sphi 0, %s68
    %s85 = sphi 0, %s69
    %s93 = sphi 0, %s95
    %s96 = sphi 0, %s93
    %s97 = sphi 0, %s96
    %s113 = sphi 0, %s97
  $region4: #{sampling_block.1} parent=0 // loop_header_branch
    %11 = sbr.rel (%p9) target = $region8
  $region5: #{sampling_block.1} parent=0 // loop_body
    %s13 = ssub.s32 %s8, 1
    %s14 = ssub.s32 %s8, 2
    %s24 = sadd.s32 1, %s17
    %p25 = scmp.ge.s32.totalorder %s24, 1
    %s26 = scalar_select %p25, 0, %s24
    %s27 = sadd.s32 1, %s16
    %s28 = scalar_select %p25, %s27, %s16
    %p29 = scmp.ge.s32.totalorder %s28, 1
    %s30 = scalar_select %p29, 0, %s28
    %s31 = sadd.s32 1, %s15
    %s32 = scalar_select %p29, %s31, %s15
    %p33 = scmp.ge.s32.totalorder %s32, 2
    %s34 = scalar_select %p33, 0, %s32
    %s35 = ssub.s32 %s15, %s34
    %s36 = ssub.s32 %s17, %s26
    %s37 = sor.u32 %s35, %s36
    %p38 = scmp.eq.s32.totalorder %s37, 0
    %s40 = sadd.s32 %s39, 1
    %s41 = scalar_select %p38, %s39, %s40
    %p44 = pneg %p38
    %p45 = scmp.eq.s32.totalorder %s8, 1
    %p46 = por %p44, %p45
    %p47 = scmp.ne.s32.totalorder %s39, %s42
    %p48 = scmp.eq.s32.totalorder %s8, 0
    %p49 = por %p47, %p48
    %p50 = scmp.ne.s32.totalorder %s39, %s42
    %p51 = scmp.eq.s32.totalorder %s13, 1
    %p52 = por %p50, %p51
    %p53 = scmp.ne.s32.totalorder %s42, %s43
    %p54 = scmp.eq.s32.totalorder %s13, 0
    %p55 = por %p53, %p54
    %p56 = scmp.ne.s32.totalorder %s42, %s43
    %p57 = scmp.eq.s32.totalorder %s14, 1
    %p58 = por %p56, %p57
    %p60 = scmp.ne.s32.totalorder %s43, %s59
    %p61 = scmp.eq.s32.totalorder %s14, 0
    %p62 = por %p60, %p61
    %s63 = ssub.s32 %s16, %s30
    %p64 = scmp.eq.s32.totalorder %s63, 0
    %s66 = sadd.s32 %s65, 1
    %s67 = scalar_select %p64, %s65, %s66
    %p70 = pneg %p64
    %p71 = scmp.eq.s32.totalorder %s8, 1
    %p72 = por %p70, %p71
    %p73 = scmp.ne.s32.totalorder %s65, %s68
    %p74 = scmp.eq.s32.totalorder %s8, 0
    %p75 = por %p73, %p74
    %p76 = scmp.ne.s32.totalorder %s65, %s68
    %p77 = scmp.eq.s32.totalorder %s13, 1
    %p78 = por %p76, %p77
    %p79 = scmp.ne.s32.totalorder %s68, %s69
    %p80 = scmp.eq.s32.totalorder %s13, 0
    %p81 = por %p79, %p80
    %p82 = scmp.ne.s32.totalorder %s68, %s69
    %p83 = scmp.eq.s32.totalorder %s14, 1
    %p84 = por %p82, %p83
    %p86 = scmp.ne.s32.totalorder %s69, %s85
    %p87 = scmp.eq.s32.totalorder %s14, 0
    %p88 = por %p86, %p87
    %s89 = ssub.s32 %s15, %s34
    %s90 = ssub.s32 %s16, %s30
    %s91 = sor.u32 %s89, %s90
    %p92 = scmp.eq.s32.totalorder %s91, 0
    %s94 = sadd.s32 %s93, 1
    %s95 = scalar_select %p92, %s93, %s94
    %p98 = pneg %p92
    %p99 = scmp.eq.s32.totalorder %s8, 1
    %p100 = por %p98, %p99
    %p101 = scmp.ne.s32.totalorder %s93, %s96
    %p102 = scmp.eq.s32.totalorder %s8, 0
    %p103 = por %p101, %p102
    %p104 = scmp.ne.s32.totalorder %s93, %s96
    %p105 = scmp.eq.s32.totalorder %s13, 1
    %p106 = por %p104, %p105
    %p107 = scmp.ne.s32.totalorder %s96, %s97
    %p108 = scmp.eq.s32.totalorder %s13, 0
    %p109 = por %p107, %p108
    %p110 = scmp.ne.s32.totalorder %s96, %s97
    %p111 = scmp.eq.s32.totalorder %s14, 1
    %p112 = por %p110, %p111
    %p114 = scmp.ne.s32.totalorder %s97, %s113
    %p115 = scmp.eq.s32.totalorder %s14, 0
    %p116 = por %p114, %p115
    %p117 = scmp.le.s32.totalorder 1, %s8
    %p118 = scmp.lt.s32.totalorder %s8, 3
    %p119 = pnand %p117, %p118
    %p120 = pneg %p119
    // Predicated region
    $region9: #{sampling_block.1} parent=5 // pred_check
      _
    $region10: #{sampling_block.1} parent=5 // pred_check_branch
      %122 = sbr.rel (%p119) target = $region12
    $region11: #{sampling_block.1} parent=5 // pred_region
      %s123 = ssub.s32 %s8, 1
      // Predicated region
      $region13: #{sampling_block.1} parent=11 // pred_check
        %p124 = pneg %p81
      $region14: #{sampling_block.1} parent=11 // pred_check_branch
        %126 = sbr.rel (%p124) target = $region16
      $region15: #{sampling_block.1} parent=11 // pred_region
        %p127 = scmp.lt.s32.totalorder %s19, 0
        %s128 = scalar_select %p127, %s19, 0
        %s129 = smul.addr %s128, 4
        %s130 = scalar_lea.vmem %s1, %s129
      $region16: #{sampling_block.1} parent=11 // pred_fallthru
        _
    $region12: #{sampling_block.1} parent=5 // pred_fallthru
      _
    %p131 = scmp.lt.s32.totalorder %s8, 2
    // Predicated region
    $region17: #{sampling_block.1} parent=5 // pred_check
      %p132 = pneg %p131
    $region18: #{sampling_block.1} parent=5 // pred_check_branch
      %134 = sbr.rel (%p132) target = $region20
    $region19: #{sampling_block.1} parent=5 // pred_region
      // Predicated region
      $region21: #{sampling_block.1} parent=19 // pred_check
        %p135 = pneg %p49
      $region22: #{sampling_block.1} parent=19 // pred_check_branch
        %137 = sbr.rel (%p135) target = $region24
      $region23: #{sampling_block.1} parent=19 // pred_region
        %p138 = scmp.lt.s32.totalorder %s15, 1
        %s139 = scalar_select %p138, %s15, 1
        %p140 = scmp.lt.s32.totalorder %s17, 0
        %s141 = scalar_select %p140, %s17, 0
        %s142 = smul.addr %s139, 6
        %s143 = sadd.s32 %s141, %s142
        %s144 = smul.addr %s143, 4
        %s145 = scalar_lea.vmem %s0, %s144
      $region24: #{sampling_block.1} parent=19 // pred_fallthru
        _
    $region20: #{sampling_block.1} parent=5 // pred_fallthru
      _
    %p146 = scmp.le.s32.totalorder 1, %s8
    %p147 = scmp.lt.s32.totalorder %s8, 3
    %p148 = pnand %p146, %p147
    %p149 = pneg %p148
    // Predicated region
    $region25: #{sampling_block.1} parent=5 // pred_check
      _
    $region26: #{sampling_block.1} parent=5 // pred_check_branch
      %151 = sbr.rel (%p148) target = $region28
    $region27: #{sampling_block.1} parent=5 // pred_region
      %s152 = ssub.s32 %s8, 1
      %p153 = scmp.lt.s32.totalorder %s18, 1
      %s154 = scalar_select %p153, %s18, 1
      %p155 = scmp.lt.s32.totalorder %s20, 0
      %s156 = scalar_select %p155, %s20, 0
      %s157 = smul.addr %s154, 6
      %s158 = sadd.s32 %s156, %s157
      %s159 = smul.addr %s158, 4
      %s160 = scalar_lea.vmem %s0, %s159
      %p161 = pneg %p55
      %p162 = pneg %p52
      %p163 = scmp.lt.s32.totalorder %s19, 0
      %s164 = scalar_select %p163, %s19, 0
      %s165 = smul.addr %s164, 4
      %s166 = scalar_lea.vmem %s1, %s165
      %p167 = pneg %p81
      %p168 = pneg %p78
      %p169 = pneg %p109
      %p170 = pneg %p106
      %p171 = scmp.lt.s32.totalorder %s18, 1
      %s172 = scalar_select %p171, %s18, 1
      %p173 = scmp.lt.s32.totalorder %s19, 0
      %s174 = scalar_select %p173, %s19, 0
      %s175 = sadd.s32 %s174, %s172
      %s176 = smul.addr %s175, 4
      %s177 = scalar_lea.vmem %s2, %s176
      %p178 = scmp.lt.s32.totalorder %s18, 1
      %s179 = scalar_select %p178, %s18, 1
      %p180 = scmp.lt.s32.totalorder %s20, 0
      %s181 = scalar_select %p180, %s20, 0
      %s182 = smul.addr %s179, 6
      %s183 = sadd.s32 %s181, %s182
      %s184 = smul.addr %s183, 4
      %s185 = scalar_lea.vmem %s0, %s184
      %p186 = scmp.lt.s32.totalorder %s19, 0
      %s187 = scalar_select %p186, %s19, 0
      %s188 = smul.addr %s187, 4
      %s189 = scalar_lea.vmem %s1, %s188
      %p190 = scmp.lt.s32.totalorder %s18, 1
      %s191 = scalar_select %p190, %s18, 1
      %p192 = scmp.lt.s32.totalorder %s19, 0
      %s193 = scalar_select %p192, %s19, 0
      %s194 = sadd.s32 %s193, %s191
      %s195 = smul.addr %s194, 4
      %s196 = scalar_lea.vmem %s2, %s195
      %p198 = scmp.eq.s32.totalorder %s20, 0
      // Predicated region
      $region29: #{sampling_block.1} parent=27 // pred_check
        %p199 = pneg %p198
      $region30: #{sampling_block.1} parent=27 // pred_check_branch
        %201 = sbr.rel (%p199) target = $region32
      $region31: #{sampling_block.1} parent=27 // pred_region
        %vm202 = vcmask 7168
        %203 = vst.msk [vmem:[#allocation3] sm:$0xff] %vm202, 0.0
        %204 = vst.msk [vmem:[#allocation4] sm:$0xff] %vm202, 0.0
      $region32: #{sampling_block.1} parent=27 // pred_fallthru
        _
      %v205 = vld [vmem:[%s189] sm:$0xf]
      %v206 = vld [vmem:[%s185] sm:$0xf]
      %v207 = vld [vmem:[%s185 + $0x4] sm:$0xf]
      %v208 = vld [vmem:[%s185 + $0x8] sm:$0xf]
      %v209 = vld [vmem:[%s185 + $0xc] sm:$0xf]
      %v210 = vld [vmem:[%s185 + $0x10] sm:$0xf]
      %v211 = vld [vmem:[%s185 + $0x14] sm:$0xf]
      %v218 = vunpack.c.l.b16 %v206
      %v219 = vunpack.c.l.b16 %v207
      %v220 = vunpack.c.l.b16 %v208
      %v221 = vunpack.c.l.b16 %v209
      %v222 = vunpack.c.l.b16 %v210
      %v223 = vunpack.c.l.b16 %v211
      %v224 = vpack.c.b16 %v219, %v218
      %v225 = vpack.c.b16 %v221, %v220
      %v226 = vpack.c.b16 %v223, %v222
      %vm230 = vcmask 392192
      %v232 = vsel %vm230, %v205, 0
      %234 = vmatprep.subr.bf16.mxu0 0
      %235 = vmatpush1.bf16.msra.mxu0 0
      %236 = vmatprep.subr.bf16.mxu0 0
      %237 = vmatpush1.bf16.msra.mxu0 0
      %238 = vmatprep.subr.bf16.mxu0 0
      %239 = vmatpush1.bf16.msra.mxu0 0
      %240 = vmatprep.subr.bf16.mxu0 0
      %241 = vmatpush1.bf16.msra.mxu0 0
      %242 = vmatprep.subr.bf16.mxu0 0
      %243 = vmatpush1.bf16.msra.mxu0 0
      %244 = vmatprep.subr.bf16.mxu0 0
      %245 = vmatpush1.bf16.msra.mxu0 %v226
      %246 = vmatprep.subr.bf16.mxu0 0
      %247 = vmatpush1.bf16.msra.mxu0 %v225
      %248 = vmatprep.subr.bf16.mxu0 0
      %249 = vmatpush1.bf16.msra.mxu0 %v224
      %250 = vmatprep.subr.bf16.mxu0 0
      %251 = vmatpush2.bf16.msra.mxu0 0
      %252 = vmatprep.subr.bf16.mxu0 0
      %253 = vmatpush2.bf16.msra.mxu0 0
      %254 = vmatprep.subr.bf16.mxu0 0
      %255 = vmatpush2.bf16.msra.mxu0 0
      %256 = vmatprep.subr.bf16.mxu0 0
      %257 = vmatpush2.bf16.msra.mxu0 0
      %258 = vmatprep.subr.bf16.mxu0 0
      %259 = vmatpush2.bf16.msra.mxu0 0
      %260 = vmatprep.subr.bf16.mxu0 0
      %261 = vmatpush2.bf16.msra.mxu0 0
      %262 = vmatprep.subr.bf16.mxu0 0
      %263 = vmatpush2.bf16.msra.mxu0 0
      %264 = vmatprep.subr.bf16.mxu0 0
      %265 = vmatpush2.bf16.msra.mxu0 0
      %266 = vmatprep.mubr.bf16.mxu0 0
      %267 = vmatmul.mubr.bf16.gmra.mxu0 %v232
      %v268 = vpop.f32.mrf.mxu0
      %v269 = vadd.f32 0.0, %v268
      %v270 = vpop.f32.mrf.mxu0
      %v271 = vpop.f32.mrf.mxu0
      %v272 = vpop.f32.mrf.mxu0
      %273 = vdwg.mxu0
      %v274 = vld [vmem:[#allocation3] sm:$0xff]
      %275 = vadd.xlane.f32.xlu0 %v269
      %v276 = vpop.xlane.xlu0 %275
      %v277 = vadd.f32 %v274, %v276
      %vm278 = vcmask 7168
      %279 = vst.msk [vmem:[#allocation3] sm:$0xff] %vm278, %v277
      %v280 = vld [vmem:[#allocation4] sm:$0xff]
      %v281 = vmul.f32 %v269, %v269
      %282 = vadd.xlane.f32.xlu0 %v281
      %v283 = vpop.xlane.xlu0 %282
      %v284 = vadd.f32 %v280, %v283
      %285 = vst.msk [vmem:[#allocation4] sm:$0xff] %vm278, %v284
      %s286 = smul.u32 %s20, 128
      %s287 = sshra.s32 %s286, 7
      %s288 = sand.u32 %s286, 127
      %s289 = scalar_lea.vmem [#allocation2], %s287
      %290 = vst [vmem:[%s289] sm:$0xff] %v269
      // Predicated region
      $region33: #{sampling_block.1} parent=27 // pred_check
        %p291 = pneg %p198
      $region34: #{sampling_block.1} parent=27 // pred_check_branch
        %293 = sbr.rel (%p291) target = $region36
      $region35: #{sampling_block.1} parent=27 // pred_region
        %v294 = vld [vmem:[#allocation3] sm:$0xff]
        %v295 = vmul.f32 %v294, 0.015625
        %v296 = vld [vmem:[#allocation4] sm:$0xff]
        %v297 = vmul.f32 %v296, 0.015625
        %v298 = vmul.f32 %v295, %v295
        %v299 = vsub.f32 %v297, %v298
        %v300 = vmax.f32 %v299, 0.0
        %v301 = vadd.f32 %v300, 1e-05
        %v302 = vrsqrt.pop %v301
        %v303 = vld [vmem:[#allocation2] sm:$0xff]
        %305 = vset.pattern.permute.xlu0 0
        %306 = vperm.xlu0 %305, %v302
        %v307 = vpop.permute.xlu0 %306
        %v309 = vmul.f32 %v303, %v307
        %v310 = vmul.f32 %v295, %v302
        %312 = vset.pattern.permute.xlu0 0
        %313 = vperm.xlu0 %312, %v310
        %v314 = vpop.permute.xlu0 %313
        %v316 = vsub.f32 %v309, %v314
        %v317 = vmax.f32 %v316, 0.0
        %v318 = vpack.c.bf16 %v317, %v317
        %319 = vst [vmem:[%s196] sm:$0xf] %v318
      $region36: #{sampling_block.1} parent=27 // pred_fallthru
        _
      %p320 = scmp.lt.s32.totalorder %s18, 1
      %s321 = scalar_select %p320, %s18, 1
      %p322 = scmp.lt.s32.totalorder %s19, 0
      %s323 = scalar_select %p322, %s19, 0
      %s324 = sadd.s32 %s323, %s321
      %s325 = smul.addr %s324, 4
      %s326 = scalar_lea.vmem %s2, %s325
      // Predicated region
      $region37: #{sampling_block.1} parent=27 // pred_check
        %p327 = pneg %p106
      $region38: #{sampling_block.1} parent=27 // pred_check_branch
        %329 = sbr.rel (%p327) target = $region40
      $region39: #{sampling_block.1} parent=27 // pred_region
        _
      $region40: #{sampling_block.1} parent=27 // pred_fallthru
        _
    $region28: #{sampling_block.1} parent=5 // pred_fallthru
      _
    %p330 = scmp.le.s32.totalorder 2, %s8
    // Predicated region
    $region41: #{sampling_block.1} parent=5 // pred_check
      %p331 = pneg %p330
    $region42: #{sampling_block.1} parent=5 // pred_check_branch
      %333 = sbr.rel (%p331) target = $region44
    $region43: #{sampling_block.1} parent=5 // pred_region
      %s334 = ssub.s32 %s8, 2
      // Predicated region
      $region45: #{sampling_block.1} parent=43 // pred_check
        %p335 = pneg %p112
      $region46: #{sampling_block.1} parent=43 // pred_check_branch
        %337 = sbr.rel (%p335) target = $region48
      $region47: #{sampling_block.1} parent=43 // pred_region
        %p338 = scmp.lt.s32.totalorder %s21, 1
        %s339 = scalar_select %p338, %s21, 1
        %p340 = scmp.lt.s32.totalorder %s22, 0
        %s341 = scalar_select %p340, %s22, 0
        %s342 = sadd.s32 %s341, %s339
        %s343 = smul.addr %s342, 4
        %s344 = scalar_lea.vmem %s2, %s343
      $region48: #{sampling_block.1} parent=43 // pred_fallthru
        _
    $region44: #{sampling_block.1} parent=5 // pred_fallthru
      _
  $region6: #{sampling_block.1} parent=0 // loop_footer
    %s12 = sadd.s32 1, %s8
  $region7: #{sampling_block.1} parent=0 // loop_footer_branch
    %7 = sbr.rel target = $region3
  $region8: #{sampling_block.1} parent=0 // loop_exit
    _

</llo_original>
